<compile_context>
chip_gen: v7x
topology: tpu7x:2x2x1
jax: 0.10.0
libtpu: 0.0.40
codegen_flags: <defaults>
</compile_context>

<pallas_src>
import functools

import jax
import jax.numpy as jnp
from jax import lax
from jax.experimental import pallas as pl
from jax.experimental.pallas import tpu as pltpu

_LANES = 128
_SUBLANES = 8
_VMEM_BUDGET = 24 * 1024 * 1024   # planned bytes: 2 inputs x 2 bufs + 2 f32 accs
_VMEM_LIMIT = 32 * 1024 * 1024    # scoped VMEM limit handed to Mosaic


def _round_up(x: int, m: int) -> int:
    return ((x + m - 1) // m) * m


def _round_down(x: int, m: int) -> int:
    return (x // m) * m


def _block_byte_target() -> int:
    """Per-input HBM block target (~knee of the per-step-overhead roofline)."""
    try:
        kind = jax.devices()[0].device_kind.lower()
    except Exception:
        kind = ""
    if "v7" in kind:
        return 4 << 20          # ~3.2 TB/s per TC: amortize the ~0.35us step cost
    if "v5e" in kind or "v5 lite" in kind or "v5lite" in kind:
        return 1 << 20          # ~0.8 TB/s: 1 MiB is already ~88% of roofline
    return 2 << 20              # v6e / v5p / unknown


def _pick_tiles(n: int, d: int, itemsize: int, block_bytes: int):
    d_lanes = _round_up(d, _LANES)
    n_full = n if n <= _SUBLANES else _round_up(n, _SUBLANES)

    # Rows per tile: canonical 128, or the whole (tiny) batch.
    tile_n = min(128, n_full)
    tn_pad = _round_up(tile_n, _SUBLANES)

    # Lanes per tile: hit ~block_bytes per input, bounded by D and the VMEM
    # budget (2 inputs x 2 pipeline buffers in native dtype + 2 f32 accumulators).
    bytes_per_col = tn_pad * (4 * itemsize + 8)
    cap_d = max(_LANES, _round_down(_VMEM_BUDGET // bytes_per_col, _LANES))
    want_d = _round_up(max(block_bytes // max(1, tile_n * itemsize), _LANES), _LANES)
    tile_d = min(want_d, d_lanes, cap_d)

    # Degenerate shapes (small D): one tile already covers D -> grow rows so the
    # per-step HBM block stays near the knee instead of collapsing to ~64 KiB.
    if tile_d >= d_lanes and tile_n < min(n_full, 1024):
        bytes_per_row = tile_d * (4 * itemsize + 8)
        cap_n = max(_SUBLANES, _round_down(_VMEM_BUDGET // bytes_per_row, _SUBLANES))
        want_n = _round_up(max(block_bytes // max(1, tile_d * itemsize), 1), _SUBLANES)
        tile_n = max(tile_n, min(n_full, 1024, want_n, cap_n))
        tn_pad = _round_up(tile_n, _SUBLANES)

    # In-kernel slab width (static slices): ~256 KiB of f32 temporaries per slab.
    slab_w = _round_down(max(65536 // tn_pad, _LANES), _LANES)
    slab_w = max(_LANES, min(slab_w, 4096, tile_d))
    return tile_n, tile_d, slab_w


def _accum_tile(x_ref, t_ref, acc_err_ref, acc_cnt_ref, *, mode: str,
                tile_d: int, slab_w: int, pad_start: int):
    """Add this tile's errors / valid-counts into the VMEM accumulators.

    pad_start is the first invalid column inside the tile (== tile_d when the
    whole tile is in range).  It is a static Python int, so every slab is
    classified statically as full / masked / skipped: interior tiles pay no
    mask cost at all and only the single boundary slab builds an iota.
    """
    n_slabs = (tile_d + slab_w - 1) // slab_w
    for s in range(n_slabs):              # static loop, no register-carried state
        lo = s * slab_w
        if lo >= pad_start:
            break                         # slab entirely past the data -> skip
        w = min(slab_w, tile_d - lo)
        sl = slice(lo, lo + w)

        x = x_ref[:, sl].astype(jnp.float32)
        t = t_ref[:, sl].astype(jnp.float32)
        valid = jnp.isfinite(t)
        if lo + w > pad_start:            # boundary slab only: mask padded lanes
            col = lax.broadcasted_iota(jnp.int32, valid.shape, 1) + lo
            valid = jnp.logical_and(valid, col < pad_start)

        # target.where(mask, input) => (input - target) == 0 where target is
        # non-finite (also kills garbage from padded partial tiles).
        diff = jnp.where(valid, x - t, 0.0)
        err = jnp.abs(diff) if mode == "mae" else diff * diff

        # Accumulate straight into VMEM scratch: no long-lived register carries.
        acc_err_ref[:, sl] += err
        acc_cnt_ref[:, sl] += valid.astype(jnp.float32)


def _loss_kernel(x_ref, t_ref, out_ref, acc_err_ref, acc_cnt_ref, *,
                 mode: str, d: int, tile_d: int, slab_w: int, dpp: int,
                 grid_d: int, mask_cols: bool, has_tail: bool):
    p = pl.program_id(0)                  # parallel split of the D reduction
    j = pl.program_id(2)                  # D-tile index within this partition
    gj = p * dpp + j                      # global D-tile index

    @pl.when(j == 0)
    def _():
        acc_err_ref[...] = jnp.zeros_like(acc_err_ref)
        acc_cnt_ref[...] = jnp.zeros_like(acc_cnt_ref)

    accum = functools.partial(_accum_tile, x_ref, t_ref, acc_err_ref, acc_cnt_ref,
                              mode=mode, tile_d=tile_d, slab_w=slab_w)

    if mask_cols:
        last_pad_start = d - (grid_d - 1) * tile_d   # static
        if grid_d > 1:
            @pl.when(gj < grid_d - 1)     # interior tiles: no column masks at all
            def _():
                accum(pad_start=tile_d)

        @pl.when(gj == grid_d - 1)        # last D tile: mask the padded lanes
        def _():
            accum(pad_start=last_pad_start)
    elif has_tail:
        @pl.when(gj < grid_d)             # skip the clamped duplicate tail tile
        def _():
            accum(pad_start=tile_d)
    else:
        accum(pad_start=tile_d)

    # One-shot finalize per (partition, row-block): a single cross-lane reduce
    # and one small store into the combined (err_sum, count) output block.
    @pl.when(j == pl.num_programs(2) - 1)
    def _():
        out_ref[:, 0:1] = jnp.sum(acc_err_ref[...], axis=1, keepdims=True)
        out_ref[:, 1:2] = jnp.sum(acc_cnt_ref[...], axis=1, keepdims=True)


def regression_loss(inp, target, *, mode: str = "mse", sample_wise: bool = True,
                    block_bytes=None):
    """Pallas implementation of RegressionLoss.forward (NaN/Inf in target ignored)."""
    if mode not in ("mse", "rmse", "mae"):
        raise ValueError(f'mode must be one of ("mse"|"rmse"|"mae"), is {mode}.')
    assert inp.shape == target.shape

    n = inp.shape[0]
    d = 1
    for s in inp.shape[1:]:
        d *= s

    # Native dtype straight into the kernel (no HBM-doubling wrapper upcast).
    x2 = inp.reshape(n, d)
    t2 = target.reshape(n, d)
    itemsize = max(jnp.dtype(x2.dtype).itemsize, jnp.dtype(t2.dtype).itemsize)

    if block_bytes is None:
        block_bytes = _block_byte_target()
    tile_n, tile_d, slab_w = _pick_tiles(n, d, itemsize, block_bytes)

    grid_n = pl.cdiv(n, tile_n)
    grid_d = pl.cdiv(d, tile_d)
    # If a single row-block cannot feed both TensorCores (megacore / v7x),
    # split the D reduction into 2 parallel partitions combined in the epilogue.
    grid_p = 2 if (grid_n == 1 and grid_d >= 2) else 1
    dpp = pl.cdiv(grid_d, grid_p)            # D tiles per partition
    has_tail = grid_p * dpp > grid_d         # last partition has one dummy step
    n_pad = grid_n * tile_n
    mask_cols = (d % tile_d) != 0

    if has_tail:
        def d_index(pp, ii, jj):
            return (ii, jnp.minimum(pp * dpp + jj, grid_d - 1))
    else:
        def d_index(pp, ii, jj):
            return (ii, pp * dpp + jj)

    kernel = functools.partial(
        _loss_kernel, mode=mode, d=d, tile_d=tile_d, slab_w=slab_w,
        dpp=dpp, grid_d=grid_d, mask_cols=mask_cols, has_tail=has_tail)

    partials = pl.pallas_call(
        kernel,
        out_shape=jax.ShapeDtypeStruct((grid_p, n_pad, 2), jnp.float32),
        grid_spec=pltpu.PrefetchScalarGridSpec(
            num_scalar_prefetch=0,
            grid=(grid_p, grid_n, dpp),
            in_specs=[
                pl.BlockSpec((tile_n, tile_d), d_index),
                pl.BlockSpec((tile_n, tile_d), d_index),
            ],
            out_specs=pl.BlockSpec((None, tile_n, 2),
                                   lambda pp, ii, jj: (pp, ii, 0)),
            scratch_shapes=[
                pltpu.VMEM((tile_n, tile_d), jnp.float32),
                pltpu.VMEM((tile_n, tile_d), jnp.float32),
            ],
        ),
        compiler_params=pltpu.CompilerParams(
            dimension_semantics=("parallel", "parallel", "arbitrary"),
            vmem_limit_bytes=_VMEM_LIMIT,
        ),
    )(x2, t2)

    sums = jnp.sum(partials, axis=0)          # combine D partitions: (n_pad, 2)
    errsum = sums[:n, 0]                      # padded/garbage rows are discarded
    count = sums[:n, 1]

    # TODO(synk): the per-sample divide could be fused into the finalize step;
    # kept in JAX since it is a tiny (N,)-sized op and sample_wise=False needs
    # the raw sums.
    if sample_wise:
        merr = jnp.mean(errsum / count)
    else:
        merr = jnp.sum(errsum) / jnp.sum(count)
    if mode == "rmse":
        return jnp.sqrt(merr)
    return merr


def _reference(inp, target, *, mode, sample_wise):
    """Pure-JAX reference mirroring the PyTorch forward."""
    mask = jnp.isfinite(target)
    tgt = jnp.where(mask, target, inp)
    err = jnp.abs(inp - tgt) if mode == "mae" else (inp - tgt) ** 2
    data_dims = tuple(range(1, inp.ndim))
    if sample_wise:
        num_valid = jnp.sum(mask.astype(jnp.float32), axis=data_dims)
        merr = jnp.mean(jnp.sum(err, axis=data_dims) / num_valid)
    else:
        num_valid = jnp.sum(mask.astype(jnp.float32))
        merr = jnp.sum(err) / num_valid
    return jnp.sqrt(merr) if mode == "rmse" else merr


def _check_case(key, shape, dtype, block_bytes=None):
    k1, k2 = jax.random.split(key)
    x = jax.random.normal(k1, shape, dtype=jnp.float32).astype(dtype)
    t = jax.random.normal(k2, shape, dtype=jnp.float32).astype(dtype)

    # Inject non-finite values into the target (ignored by the loss).
    flat = t.reshape(-1)
    flat = flat.at[0].set(jnp.nan).at[3].set(jnp.inf).at[-1].set(-jnp.inf)
    t = flat.reshape(shape)

    ok = True
    for mode in ("mse", "rmse", "mae"):
        for sample_wise in (True, False):
            out = regression_loss(x, t, mode=mode, sample_wise=sample_wise,
                                  block_bytes=block_bytes)
            out = jax.block_until_ready(out)
            ref = _reference(x.astype(jnp.float32), t.astype(jnp.float32),
                             mode=mode, sample_wise=sample_wise)
            if not jnp.allclose(out, ref, rtol=1e-5, atol=1e-6):
                ok = False
    return ok


if __name__ == "__main__":
    key = jax.random.PRNGKey(0)
    cases = [
        ((2, 4, 16, 16), jnp.float32, None),    # aligned D=1024, tiny batch
        ((2, 4, 16, 16), jnp.bfloat16, None),   # native low-precision HBM path
        ((10, 3, 13), jnp.float32, None),       # unaligned N and D -> masked tile
        ((4, 9, 256), jnp.float32, 8 * 1024),   # tiny forced blocks: multi-tile D,
                                                # 2-way parallel D split + tail skip
    ]
    ok = True
    for shape, dtype, bb in cases:
        key, sub = jax.random.split(key)
        ok = _check_case(sub, shape, dtype, block_bytes=bb) and ok

    if ok:
        print("KERNEL_OK")
    else:
        print("KERNEL_MISMATCH")
</pallas_src>

<mosaic_0001>
module attributes {stable_mosaic.version = 11 : i64} {
  func.func @_loss_kernel(%arg0: i32, %arg1: i32, %arg2: i32, %arg3: memref<2x1024xf32, #tpu.memory_space<vmem>>, %arg4: memref<2x1024xf32, #tpu.memory_space<vmem>>, %arg5: memref<1x2x2xf32, #tpu.memory_space<vmem>>, %arg6: memref<2x1024xf32, #tpu.memory_space<vmem>>, %arg7: memref<2x1024xf32, #tpu.memory_space<vmem>>) attributes {dimension_semantics = [#tpu.dimension_semantics<parallel>, #tpu.dimension_semantics<parallel>, #tpu.dimension_semantics<arbitrary>], iteration_bounds = array<i64: 1, 1, 1>, scalar_prefetch = 0 : i64, scratch_operands = 2 : i64, tpu.core_type = #tpu.core_type<tc>, window_params = [{transform_indices = @transform_0, window_bounds = array<i64: 2, 1024>}, {transform_indices = @transform_1, window_bounds = array<i64: 2, 1024>}, {transform_indices = @transform_2, window_bounds = array<i64: 1, 2, 2>}]} {
    %c0_i32 = arith.constant 0 : i32
    %0 = arith.cmpi eq, %arg2, %c0_i32 : i32
    %1 = arith.extui %0 : i1 to i32
    %c0_i32_0 = arith.constant 0 : i32
    %2 = arith.cmpi ne, %1, %c0_i32_0 : i32
    scf.if %2 {
      %cst_15 = arith.constant 0.000000e+00 : f32
      %22 = vector.broadcast %cst_15 : f32 to vector<2x1024xf32>
      %c0_16 = arith.constant 0 : index
      %c0_17 = arith.constant 0 : index
      %23 = vector.load %arg6[%c0_16, %c0_17] : memref<2x1024xf32, #tpu.memory_space<vmem>>, vector<2x1024xf32>
      tpu.vector_store %arg6[%c0_16, %c0_17], %22 {strides = array<i32>} : memref<2x1024xf32, #tpu.memory_space<vmem>>, vector<2x1024xf32>,
      %cst_18 = arith.constant 0.000000e+00 : f32
      %24 = vector.broadcast %cst_18 : f32 to vector<2x1024xf32>
      %c0_19 = arith.constant 0 : index
      %c0_20 = arith.constant 0 : index
      %25 = vector.load %arg7[%c0_19, %c0_20] : memref<2x1024xf32, #tpu.memory_space<vmem>>, vector<2x1024xf32>
      tpu.vector_store %arg7[%c0_19, %c0_20], %24 {strides = array<i32>} : memref<2x1024xf32, #tpu.memory_space<vmem>>, vector<2x1024xf32>,
    } else {
    }
    %c0 = arith.constant 0 : index
    %c0_1 = arith.constant 0 : index
    %3 = vector.load %arg3[%c0, %c0_1] : memref<2x1024xf32, #tpu.memory_space<vmem>>, vector<2x1024xf32>
    %c0_2 = arith.constant 0 : index
    %c0_3 = arith.constant 0 : index
    %4 = vector.load %arg4[%c0_2, %c0_3] : memref<2x1024xf32, #tpu.memory_space<vmem>>, vector<2x1024xf32>
    %5 = tpu.weird %4 : vector<2x1024xf32> -> vector<2x1024xi1>
    %cst = arith.constant dense<true> : vector<2x1024xi1>
    %6 = arith.xori %5, %cst : vector<2x1024xi1>
    %7 = arith.subf %3, %4 : vector<2x1024xf32>
    %cst_4 = arith.constant 0.000000e+00 : f32
    %8 = vector.broadcast %cst_4 : f32 to vector<2x1024xf32>
    %9 = arith.select %6, %7, %8 : vector<2x1024xi1>, vector<2x1024xf32>
    %10 = arith.mulf %9, %9 : vector<2x1024xf32>
    %c0_5 = arith.constant 0 : index
    %c0_6 = arith.constant 0 : index
    %11 = vector.load %arg6[%c0_5, %c0_6] : memref<2x1024xf32, #tpu.memory_space<vmem>>, vector<2x1024xf32>
    %12 = arith.addf %11, %10 : vector<2x1024xf32>
    %c0_7 = arith.constant 0 : index
    %c0_8 = arith.constant 0 : index
    %13 = vector.load %arg6[%c0_7, %c0_8] : memref<2x1024xf32, #tpu.memory_space<vmem>>, vector<2x1024xf32>
    tpu.vector_store %arg6[%c0_7, %c0_8], %12 {strides = array<i32>} : memref<2x1024xf32, #tpu.memory_space<vmem>>, vector<2x1024xf32>,
    %c0_9 = arith.constant 0 : index
    %c0_10 = arith.constant 0 : index
    %14 = vector.load %arg7[%c0_9, %c0_10] : memref<2x1024xf32, #tpu.memory_space<vmem>>, vector<2x1024xf32>
    %15 = arith.extui %6 : vector<2x1024xi1> to vector<2x1024xi32>
    %16 = arith.sitofp %15 : vector<2x1024xi32> to vector<2x1024xf32>
    %17 = arith.addf %14, %16 : vector<2x1024xf32>
    %c0_11 = arith.constant 0 : index
    %c0_12 = arith.constant 0 : index
    %18 = vector.load %arg7[%c0_11, %c0_12] : memref<2x1024xf32, #tpu.memory_space<vmem>>, vector<2x1024xf32>
    tpu.vector_store %arg7[%c0_11, %c0_12], %17 {strides = array<i32>} : memref<2x1024xf32, #tpu.memory_space<vmem>>, vector<2x1024xf32>,
    %c0_i32_13 = arith.constant 0 : i32
    %19 = arith.cmpi eq, %arg2, %c0_i32_13 : i32
    %20 = arith.extui %19 : i1 to i32
    %c0_i32_14 = arith.constant 0 : i32
    %21 = arith.cmpi ne, %20, %c0_i32_14 : i32
    scf.if %21 {
      %c0_15 = arith.constant 0 : index
      %c0_16 = arith.constant 0 : index
      %22 = vector.load %arg6[%c0_15, %c0_16] : memref<2x1024xf32, #tpu.memory_space<vmem>>, vector<2x1024xf32>
      %cst_17 = arith.constant dense<0.000000e+00> : vector<2xf32>
      %23 = vector.multi_reduction <add>, %22, %cst_17 [1] : vector<2x1024xf32> to vector<2xf32>
      %24 = vector.shape_cast %23 : vector<2xf32> to vector<2x1xf32>
      %c0_18 = arith.constant 0 : index
      %c0_19 = arith.constant 0 : index
      %c0_20 = arith.constant 0 : index
      %25 = vector.load %arg5[%c0_18, %c0_19, %c0_20] : memref<1x2x2xf32, #tpu.memory_space<vmem>>, vector<1x2x1xf32>
      %26 = vector.shape_cast %25 : vector<1x2x1xf32> to vector<2x1xf32>
      %27 = vector.shape_cast %24 : vector<2x1xf32> to vector<1x2x1xf32>
      tpu.vector_store %arg5[%c0_18, %c0_19, %c0_20], %27 {strides = array<i32>} : memref<1x2x2xf32, #tpu.memory_space<vmem>>, vector<1x2x1xf32>,
      %c0_21 = arith.constant 0 : index
      %c0_22 = arith.constant 0 : index
      %28 = vector.load %arg7[%c0_21, %c0_22] : memref<2x1024xf32, #tpu.memory_space<vmem>>, vector<2x1024xf32>
      %cst_23 = arith.constant dense<0.000000e+00> : vector<2xf32>
      %29 = vector.multi_reduction <add>, %28, %cst_23 [1] : vector<2x1024xf32> to vector<2xf32>
      %30 = vector.shape_cast %29 : vector<2xf32> to vector<2x1xf32>
      %c0_24 = arith.constant 0 : index
      %c0_25 = arith.constant 0 : index
      %c1 = arith.constant 1 : index
      %31 = vector.load %arg5[%c0_24, %c0_25, %c1] : memref<1x2x2xf32, #tpu.memory_space<vmem>>, vector<1x2x1xf32>
      %32 = vector.shape_cast %31 : vector<1x2x1xf32> to vector<2x1xf32>
      %33 = vector.shape_cast %30 : vector<2x1xf32> to vector<1x2x1xf32>
      tpu.vector_store %arg5[%c0_24, %c0_25, %c1], %33 {strides = array<i32>} : memref<1x2x2xf32, #tpu.memory_space<vmem>>, vector<1x2x1xf32>,
    } else {
    }
    return
  }
  func.func @transform_0(%arg0: i32, %arg1: i32, %arg2: i32) -> (i32, i32) {
    %c1_i32 = arith.constant 1 : i32
    %0 = arith.muli %arg0, %c1_i32 : i32
    %1 = arith.addi %0, %arg2 : i32
    %c0_i32 = arith.constant 0 : i32
    return %arg1, %1 : i32, i32
  }
  func.func @transform_1(%arg0: i32, %arg1: i32, %arg2: i32) -> (i32, i32) {
    %c1_i32 = arith.constant 1 : i32
    %0 = arith.muli %arg0, %c1_i32 : i32
    %1 = arith.addi %0, %arg2 : i32
    %c0_i32 = arith.constant 0 : i32
    return %arg1, %1 : i32, i32
  }
  func.func @transform_2(%arg0: i32, %arg1: i32, %arg2: i32) -> (i32, i32, i32) {
    %c0_i32 = arith.constant 0 : i32
    %c0_i32_0 = arith.constant 0 : i32
    return %arg0, %arg1, %c0_i32 : i32, i32, i32
  }
}

</mosaic_0001>

<llo_original>
// kernel: tpu_custom_call.1
$region0: #{tpu_custom_call.1}
  #allocation0 [shape = 'u32[]', space=smem, size = 0x4, offset = 0x4, fixed_abs, tag = 'smem constant byte address 0x4 - core index']
  #allocation1 [shape = 'u32[144,128]{1,0:T(1,128)}', space=vmem, size = 0x12000, scoped, tag = 'internal scratch']
  #allocation2 [shape = 'f32[2,1024]{1,0:T(2,128)}', space=vmem, size = 0x2000, scoped, tag = 'scratch operand']
  #allocation3 [shape = 'f32[2,1024]{1,0:T(2,128)}', space=vmem, size = 0x2000, scoped, tag = 'scratch operand']
  %s0 = inlined_call_operand.hbm [shape: f32[2,1024], index: 0, kind: input, shape index: {}]
  %s1 = inlined_call_operand.hbm [shape: f32[2,1024], index: 1, kind: input, shape index: {}]
  %s2 = inlined_call_operand.hbm [shape: f32[1,2,2], index: 2, kind: output, shape index: {}]
  %s3 = sld [smem:[#allocation0]]
  $region34: #{tpu_custom_call.1} parent=0
    _
  %s5 = ssub.s32 1, %s3
  %s6 = scalar_select 0, %s5, %s3
  $region1: #{tpu_custom_call.1} parent=0
    #allocation4 [shape = 'u8[8192]{0}', space=vmem, size = 0x2000, scoped, tag = 'input window, operand 0, single buffered']
    #allocation5 [shape = 's32[1]{0}', space=sflag, size = 0x4, scoped, tag = 'scoped memory for tpu_custom_call.1']
    #allocation6 [shape = 's32[1]{0}', space=sflag, size = 0x4, scoped, tag = 'scoped memory for tpu_custom_call.1']
    #allocation7 [shape = 'u8[8192]{0}', space=vmem, size = 0x2000, scoped, tag = 'input window, operand 1, single buffered']
    #allocation8 [shape = 's32[1]{0}', space=sflag, size = 0x4, scoped, tag = 'scoped memory for tpu_custom_call.1']
    #allocation9 [shape = 'u8[1024]{0}', space=vmem, size = 0x400, scoped, tag = 'output window, operand 0, single buffered']
    %7 = vsyncpa [#allocation5], 0
    %8 = vsyncpa [#allocation8], 0
    %9 = vsyncpa [#allocation6], 0
    // Predicated region
    $region2: #{tpu_custom_call.1} parent=1 // pred_check
      _
    $region3: #{tpu_custom_call.1} parent=1 // pred_check_branch
      %11 = sbr.rel (0) target = $region5
    $region4: #{tpu_custom_call.1} parent=1 // pred_region
      %s12 = sadd.s32 0, 0
      %s13 = smul.u32 8, %s12
      %s15 = ssub.s32 256, 256
      %16 = vsyncadd [#allocation5], %s15
      %s17 = smul.addr %s13, 32
      %s18 = scalar_lea.hbm %s0, %s17
      %s20 = sshll.u32 [#allocation4], 4
      %s21 = int_to_ptr.vmem [resolvable:$true] %s20
      %23 = dma.hbm_to_vmem [thread:$0]  %s18, 256, %s21, [#allocation5]
    $region5: #{tpu_custom_call.1} parent=1 // pred_fallthru
      _
    // Predicated region
    $region6: #{tpu_custom_call.1} parent=1 // pred_check
      _
    $region7: #{tpu_custom_call.1} parent=1 // pred_check_branch
      %25 = sbr.rel (0) target = $region9
    $region8: #{tpu_custom_call.1} parent=1 // pred_region
      %s26 = sadd.s32 0, 0
      %s27 = smul.u32 8, %s26
      %s29 = ssub.s32 256, 256
      %30 = vsyncadd [#allocation8], %s29
      %s31 = smul.addr %s27, 32
      %s32 = scalar_lea.hbm %s1, %s31
      %s34 = sshll.u32 [#allocation7], 4
      %s35 = int_to_ptr.vmem [resolvable:$true] %s34
      %37 = dma.hbm_to_vmem [thread:$0]  %s32, 256, %s35, [#allocation8]
    $region9: #{tpu_custom_call.1} parent=1 // pred_fallthru
      _
    // Predicated region
    $region10: #{tpu_custom_call.1} parent=1 // pred_check
      _
    $region11: #{tpu_custom_call.1} parent=1 // pred_check_branch
      %39 = sbr.rel (0) target = $region13
    $region12: #{tpu_custom_call.1} parent=1 // pred_region
      %40 = dma.done [#allocation5], 256
    $region13: #{tpu_custom_call.1} parent=1 // pred_fallthru
      _
    // Predicated region
    $region14: #{tpu_custom_call.1} parent=1 // pred_check
      _
    $region15: #{tpu_custom_call.1} parent=1 // pred_check_branch
      %42 = sbr.rel (0) target = $region17
    $region16: #{tpu_custom_call.1} parent=1 // pred_region
      %43 = dma.done [#allocation8], 256
    $region17: #{tpu_custom_call.1} parent=1 // pred_fallthru
      _
    %s44 = sadd.s32 0, 0
    %s45 = smul.u32 8, %s44
    %s46 = sadd.s32 0, 0
    %s47 = smul.u32 8, %s46
    %p48 = scmp.eq.s32.totalorder 0, 0
    // Predicated region
    $region18: #{tpu_custom_call.1} parent=1 // pred_check
      %p49 = pneg %p48
    $region19: #{tpu_custom_call.1} parent=1 // pred_check_branch
      %51 = sbr.rel (%p49) target = $region21
    $region20: #{tpu_custom_call.1} parent=1 // pred_region
      %52 = vst [vmem:[#allocation2] sm:$0xff] 0.0
      %53 = vst [vmem:[#allocation2 + $0x8] sm:$0xff] 0.0
      %54 = vst [vmem:[#allocation3] sm:$0xff] 0.0
      %55 = vst [vmem:[#allocation3 + $0x8] sm:$0xff] 0.0
    $region21: #{tpu_custom_call.1} parent=1 // pred_fallthru
      _
    %v56 = vld [vmem:[#allocation4] sm:$0xff]
    %v57 = vld [vmem:[#allocation4 + $0x8] sm:$0xff]
    %v58 = vld [vmem:[#allocation7] sm:$0xff]
    %v59 = vld [vmem:[#allocation7 + $0x8] sm:$0xff]
    %vm60 = vweird.f32 %v58
    %vm61 = vweird.f32 %v59
    %vm62 = vmxor %vm60, 1
    %vm63 = vmxor %vm61, 1
    %v64 = vsub.f32 %v56, %v58
    %v65 = vsub.f32 %v57, %v59
    %v66 = vsel %vm62, %v64, 0.0
    %v67 = vsel %vm63, %v65, 0.0
    %v68 = vmul.f32 %v66, %v66
    %v69 = vmul.f32 %v67, %v67
    %v70 = vld [vmem:[#allocation2] sm:$0xff]
    %v71 = vld [vmem:[#allocation2 + $0x8] sm:$0xff]
    %v72 = vadd.f32 %v70, %v68
    %v73 = vadd.f32 %v71, %v69
    %74 = vst [vmem:[#allocation2] sm:$0xff] %v72
    %75 = vst [vmem:[#allocation2 + $0x8] sm:$0xff] %v73
    %v76 = vld [vmem:[#allocation3] sm:$0xff]
    %v77 = vld [vmem:[#allocation3 + $0x8] sm:$0xff]
    %v78 = vsel %vm62, 1, 0
    %v79 = vsel %vm63, 1, 0
    %v80 = vcvt.s32.f32 %v78
    %v81 = vcvt.s32.f32 %v79
    %v82 = vadd.f32 %v76, %v80
    %v83 = vadd.f32 %v77, %v81
    %84 = vst [vmem:[#allocation3] sm:$0xff] %v82
    %85 = vst [vmem:[#allocation3 + $0x8] sm:$0xff] %v83
    // Predicated region
    $region22: #{tpu_custom_call.1} parent=1 // pred_check
      %p86 = pneg %p48
    $region23: #{tpu_custom_call.1} parent=1 // pred_check_branch
      %88 = sbr.rel (%p86) target = $region25
    $region24: #{tpu_custom_call.1} parent=1 // pred_region
      %v89 = vld [vmem:[#allocation2] sm:$0xff]
      %v90 = vld [vmem:[#allocation2 + $0x8] sm:$0xff]
      %v93 = vcombine.high %v89, %v89
      %v95 = vunpack.c.l.s4 1983009808
      %v96 = vunpack.c.0.s8 %v95
      %v97 = vlaneseq
      %v98 = vshrl.u32 %v97, 7
      %v99 = vsub.s32 %v96, %v98
      %v100 = vrot.slane %v89, %v99
      %v102 = vunpack.c.l.s4 1983009808
      %v103 = vunpack.c.0.s8 %v102
      %v104 = vlaneseq
      %v105 = vshrl.u32 %v104, 7
      %v106 = vsub.s32 %v103, %v105
      %v107 = vrot.slane %v93, %v106
      %v108 = vcombine.high %v100, %v100
      %v109 = vcombine.high %v107, %v107
      %v110 = vcombine.high %v90, %v90
      %v112 = vunpack.c.l.s4 1983009808
      %v113 = vunpack.c.0.s8 %v112
      %v114 = vlaneseq
      %v115 = vshrl.u32 %v114, 7
      %v116 = vsub.s32 %v113, %v115
      %v117 = vrot.slane %v90, %v116
      %v119 = vunpack.c.l.s4 1983009808
      %v120 = vunpack.c.0.s8 %v119
      %v121 = vlaneseq
      %v122 = vshrl.u32 %v121, 7
      %v123 = vsub.s32 %v120, %v122
      %v124 = vrot.slane %v110, %v123
      %v125 = vcombine.high %v117, %v117
      %v126 = vcombine.high %v124, %v124
      %vm135 = vcmask 1041408
      %v136 = vsel %vm135, %v100, 0.0
      %v137 = vsel %vm135, %v108, 0.0
      %v138 = vadd.f32 %v136, %v137
      %v139 = vsel %vm135, %v107, 0.0
      %v140 = vadd.f32 %v138, %v139
      %v141 = vsel %vm135, %v109, 0.0
      %v142 = vadd.f32 %v140, %v141
      %v143 = vsel %vm135, %v117, 0.0
      %v144 = vadd.f32 %v142, %v143
      %v145 = vsel %vm135, %v125, 0.0
      %v146 = vadd.f32 %v144, %v145
      %v147 = vsel %vm135, %v124, 0.0
      %v148 = vadd.f32 %v146, %v147
      %v149 = vsel %vm135, %v126, 0.0
      %v150 = vadd.f32 %v148, %v149
      %151 = vadd.xlane.f32.xlu0 %v150
      %v152 = vpop.xlane.xlu0 %151
      %vm153 = vcmask 1024
      %154 = vst.msk [vmem:[#allocation9] sm:$0x3] %vm153, %v152
      %v155 = vld [vmem:[#allocation3] sm:$0xff]
      %v156 = vld [vmem:[#allocation3 + $0x8] sm:$0xff]
      %v159 = vcombine.high %v155, %v155
      %v161 = vunpack.c.l.s4 1983009808
      %v162 = vunpack.c.0.s8 %v161
      %v163 = vlaneseq
      %v164 = vshrl.u32 %v163, 7
      %v165 = vsub.s32 %v162, %v164
      %v166 = vrot.slane %v155, %v165
      %v168 = vunpack.c.l.s4 1983009808
      %v169 = vunpack.c.0.s8 %v168
      %v170 = vlaneseq
      %v171 = vshrl.u32 %v170, 7
      %v172 = vsub.s32 %v169, %v171
      %v173 = vrot.slane %v159, %v172
      %v174 = vcombine.high %v166, %v166
      %v175 = vcombine.high %v173, %v173
      %v176 = vcombine.high %v156, %v156
      %v178 = vunpack.c.l.s4 1983009808
      %v179 = vunpack.c.0.s8 %v178
      %v180 = vlaneseq
      %v181 = vshrl.u32 %v180, 7
      %v182 = vsub.s32 %v179, %v181
      %v183 = vrot.slane %v156, %v182
      %v185 = vunpack.c.l.s4 1983009808
      %v186 = vunpack.c.0.s8 %v185
      %v187 = vlaneseq
      %v188 = vshrl.u32 %v187, 7
      %v189 = vsub.s32 %v186, %v188
      %v190 = vrot.slane %v176, %v189
      %v191 = vcombine.high %v183, %v183
      %v192 = vcombine.high %v190, %v190
      %v201 = vsel %vm135, %v166, 0.0
      %v202 = vsel %vm135, %v174, 0.0
      %v203 = vadd.f32 %v201, %v202
      %v204 = vsel %vm135, %v173, 0.0
      %v205 = vadd.f32 %v203, %v204
      %v206 = vsel %vm135, %v175, 0.0
      %v207 = vadd.f32 %v205, %v206
      %v208 = vsel %vm135, %v183, 0.0
      %v209 = vadd.f32 %v207, %v208
      %v210 = vsel %vm135, %v191, 0.0
      %v211 = vadd.f32 %v209, %v210
      %v212 = vsel %vm135, %v190, 0.0
      %v213 = vadd.f32 %v211, %v212
      %v214 = vsel %vm135, %v192, 0.0
      %v215 = vadd.f32 %v213, %v214
      %216 = vadd.xlane.f32.xlu0 %v215
      %v217 = vpop.xlane.xlu0 %216
      %vm218 = vcmask 9224
      %219 = vst.msk [vmem:[#allocation9] sm:$0x3] %vm218, %v217
    $region25: #{tpu_custom_call.1} parent=1 // pred_fallthru
      _
    // Predicated region
    $region26: #{tpu_custom_call.1} parent=1 // pred_check
      _
    $region27: #{tpu_custom_call.1} parent=1 // pred_check_branch
      %221 = sbr.rel (0) target = $region29
    $region28: #{tpu_custom_call.1} parent=1 // pred_region
      %s223 = ssub.s32 32, 32
      %224 = vsyncadd [#allocation6], %s223
      %s226 = sshll.u32 [#allocation9], 4
      %s227 = int_to_ptr.vmem [resolvable:$true] %s226
      %229 = dma.vmem_to_hbm [thread:$0]  %s227, 32, %s2, [#allocation6]
    $region29: #{tpu_custom_call.1} parent=1 // pred_fallthru
      _
    // Predicated region
    $region30: #{tpu_custom_call.1} parent=1 // pred_check
      _
    $region31: #{tpu_custom_call.1} parent=1 // pred_check_branch
      %231 = sbr.rel (0) target = $region33
    $region32: #{tpu_custom_call.1} parent=1 // pred_region
      %232 = dma.done [#allocation6], 32
    $region33: #{tpu_custom_call.1} parent=1 // pred_fallthru
      _
    %233 = vsyncpa [#allocation5], 1
    %234 = vsyncpa [#allocation8], 1
    %235 = vsyncpa [#allocation6], 1

</llo_original>
